<compile_context>
chip_gen: v7x
topology: tpu7x:2x2x1
jax: 0.10.0
libtpu: 0.0.40
codegen_flags: <defaults>
</compile_context>

<pallas_src>
import functools

import jax
import jax.numpy as jnp
from jax.experimental import pallas as pl
from jax.experimental.pallas import tpu as pltpu

FP8_MAX = 448.0  # float8_e4m3fn finite max


def _silu_mul_fp8_kernel(scale_ref, gate_ref, up_ref, out_ref, *, compute_dtype):
    """scale_ref: SMEM (1,) f32 (scalar prefetch); gate/up: (Tblk, Dblk); out: (Tblk, Dblk) fp8."""
    gate = gate_ref[...].astype(compute_dtype)
    up = up_ref[...].astype(compute_dtype)
    half = jnp.asarray(0.5, compute_dtype)
    one = jnp.asarray(1.0, compute_dtype)
    # silu(x) = x * sigmoid(x);  sigmoid via a single tanh on the EUP (1 push/elem).
    sig = half * (jnp.tanh(gate * half) + one)
    y = gate * sig * up
    inv_scale = (1.0 / scale_ref[0]).astype(compute_dtype)  # one scalar divide per step
    q = jnp.clip(y * inv_scale, -FP8_MAX, FP8_MAX)
    out_ref[...] = q.astype(out_ref.dtype)


def _round_up(x, m):
    return (x + m - 1) // m * m


def _vmem_budget_bytes():
    """Usable double-buffered tile budget + explicit scoped-VMEM limit, per generation."""
    try:
        physical = int(pltpu.get_tpu_info().vmem_capacity_bytes)
    except Exception:
        physical = 64 * 1024 * 1024  # conservative: v7x per-TC VMEM
    limit = physical // 2                       # leave half for compiler scratch / headroom
    budget = max(8 * 1024 * 1024, limit - 4 * 1024 * 1024)
    return budget, limit


def _choose_tiles(num_tokens, d, in_itemsize, budget_bytes):
    """Pick lane-dense (block_t, block_d) within the double-buffered VMEM budget."""
    # Double-buffered footprint: 2 input tiles (gate, up) * 2 bufs + 1 fp8 out tile * 2 bufs.
    def footprint(bt, bd):
        return bt * bd * (4 * in_itemsize + 2)

    # Prefer the full hidden dim (contiguous per-row reads of each half, fewest steps).
    block_d = d
    if footprint(32, d) > budget_bytes:
        block_d = 128  # last resort (d is asserted to be a multiple of 128)
        for cand in (2048, 1024, 512, 256, 128):
            if d % cand == 0 and footprint(32, cand) <= budget_bytes:
                block_d = cand
                break

    # Token tile: largest multiple of 32 (fp8 sublane packing) within budget, <= 1024,
    # and no bigger than the 32-rounded token count.
    max_bt = budget_bytes // (block_d * (4 * in_itemsize + 2))
    t_cap = min(1024, _round_up(num_tokens, 32))
    block_t = max(32, min(t_cap, (max_bt // 32) * 32))
    return block_t, block_d


@jax.jit
def silu_mul_scaled_fp8_quant(x, scale):
    """x: [T, 2*d] float32 or bfloat16 (bf16 preferred: halves HBM read traffic);
    scale: scalar/[1] f32.  Returns (q_fp8[T, d], scale)."""
    T, two_d = x.shape
    assert two_d % 2 == 0
    d = two_d // 2
    assert d % 128 == 0, "hidden size must be a multiple of 128 (lane alignment)"

    in_itemsize = jnp.dtype(x.dtype).itemsize
    budget_bytes, vmem_limit = _vmem_budget_bytes()
    block_t, block_d = _choose_tiles(T, d, in_itemsize, budget_bytes)

    # bf16 compute on chips with bf16 VPU/EUP (v6e/v7x); f32 otherwise (v5e-safe).
    kind = jax.devices()[0].device_kind.lower()
    bf16_ok = ("v6" in kind) or ("v7" in kind)
    compute_dtype = jnp.bfloat16 if (x.dtype == jnp.bfloat16 and bf16_ok) else jnp.float32

    scale_arr = jnp.asarray(scale, jnp.float32).reshape(1)
    n_dj = d // block_d  # block-index offset of the "up" half along the hidden axis

    # Token axis leading (larger), ragged last tile handled by Pallas masking.
    grid = (pl.cdiv(T, block_t), d // block_d)

    cost = pl.CostEstimate(
        flops=6 * T * d,
        transcendentals=T * d,
        bytes_accessed=T * two_d * in_itemsize + T * d * 1 + 4,
    )

    kernel = functools.partial(_silu_mul_fp8_kernel, compute_dtype=compute_dtype)

    q = pl.pallas_call(
        kernel,
        out_shape=jax.ShapeDtypeStruct((T, d), jnp.float8_e4m3fn),
        grid_spec=pltpu.PrefetchScalarGridSpec(
            num_scalar_prefetch=1,  # scale lands in SMEM
            grid=grid,
            in_specs=[
                # gate half: columns [j*block_d, ...)
                pl.BlockSpec((block_t, block_d), lambda i, j, s: (i, j)),
                # up half: same array, offset by d (= n_dj blocks) along the lane axis
                pl.BlockSpec((block_t, block_d), lambda i, j, s: (i, j + n_dj)),
            ],
            out_specs=pl.BlockSpec((block_t, block_d), lambda i, j, s: (i, j)),
        ),
        compiler_params=pltpu.CompilerParams(
            dimension_semantics=("parallel", "parallel"),
            vmem_limit_bytes=vmem_limit,
        ),
        cost_estimate=cost,
    )(scale_arr, x, x)

    return q, scale_arr


if __name__ == "__main__":
    import numpy as np

    key = jax.random.PRNGKey(0)
    kx, ks = jax.random.split(key)

    def reference(x_np, d, s_np):
        gate, up = x_np[:, :d], x_np[:, d:]
        return gate * (1.0 / (1.0 + np.exp(-gate))) * up

    def check(x, scale, T, D):
        q, s = silu_mul_scaled_fp8_quant(x, scale)
        jax.block_until_ready(q)
        assert q.shape == (T, D) and q.dtype == jnp.float8_e4m3fn
        x_np = np.asarray(x, dtype=np.float32)
        s_np = float(np.asarray(s)[0])
        y_ref = reference(x_np, D, s_np)
        deq = np.asarray(q).astype(np.float32) * s_np
        unclamped = np.abs(y_ref / s_np) < FP8_MAX
        tol = 0.0625 * np.abs(y_ref) + s_np * 3e-2
        assert np.all(np.abs(deq - y_ref)[unclamped] <= tol[unclamped]), "fp8 quant mismatch"

    # Small shapes consistent with the module: tokens=64, hidden=128 -> x: [64, 256]
    T, D = 64, 128
    x = jax.random.normal(kx, (T, 2 * D), dtype=jnp.float32)
    # torch.rand(1) analogue: deterministic uniform scale in (0, 1)
    scale = jax.random.uniform(ks, (1,), dtype=jnp.float32, minval=0.05, maxval=1.0)
    check(x, scale, T, D)

    # Ragged token count (exercises masked last-tile stores, no wrapper pad/slice).
    T2 = 50
    x2 = jax.random.normal(kx, (T2, 2 * D), dtype=jnp.float32)
    check(x2, scale, T2, D)

    # bf16 input path (halved HBM read traffic; bf16 compute on v6e/v7x, f32 on v5e).
    q_bf16, _ = silu_mul_scaled_fp8_quant(x.astype(jnp.bfloat16), scale)
    jax.block_until_ready(q_bf16)
    assert q_bf16.shape == (T, D) and q_bf16.dtype == jnp.float8_e4m3fn

    print("KERNEL_OK")
</pallas_src>

<mosaic_0001>
module attributes {stable_mosaic.version = 11 : i64} {
  func.func @_silu_mul_fp8_kernel(%arg0: i32, %arg1: i32, %arg2: memref<1xf32, #tpu.memory_space<smem>>, %arg3: memref<64x128xf32, #tpu.memory_space<vmem>>, %arg4: memref<64x128xf32, #tpu.memory_space<vmem>>, %arg5: memref<64x128xf8E4M3FN, #tpu.memory_space<vmem>>) attributes {dimension_semantics = [#tpu.dimension_semantics<parallel>, #tpu.dimension_semantics<parallel>], iteration_bounds = array<i64: 1, 1>, scalar_prefetch = 1 : i64, scratch_operands = 0 : i64, tpu.core_type = #tpu.core_type<tc>, window_params = [{transform_indices = @transform_0, window_bounds = array<i64: 64, 128>}, {transform_indices = @transform_1, window_bounds = array<i64: 64, 128>}, {transform_indices = @transform_2, window_bounds = array<i64: 64, 128>}]} {
    %c0 = arith.constant 0 : index
    %c0_0 = arith.constant 0 : index
    %0 = vector.load %arg3[%c0, %c0_0] : memref<64x128xf32, #tpu.memory_space<vmem>>, vector<64x128xf32>
    %c0_1 = arith.constant 0 : index
    %c0_2 = arith.constant 0 : index
    %1 = vector.load %arg4[%c0_1, %c0_2] : memref<64x128xf32, #tpu.memory_space<vmem>>, vector<64x128xf32>
    %cst = arith.constant 5.000000e-01 : f32
    %2 = vector.broadcast %cst : f32 to vector<64x128xf32>
    %3 = arith.mulf %0, %2 : vector<64x128xf32>
    %4 = math.tanh %3 : vector<64x128xf32>
    %cst_3 = arith.constant 1.000000e+00 : f32
    %5 = vector.broadcast %cst_3 : f32 to vector<64x128xf32>
    %6 = arith.addf %4, %5 : vector<64x128xf32>
    %cst_4 = arith.constant 5.000000e-01 : f32
    %7 = vector.broadcast %cst_4 : f32 to vector<64x128xf32>
    %8 = arith.mulf %7, %6 : vector<64x128xf32>
    %9 = arith.mulf %0, %8 : vector<64x128xf32>
    %10 = arith.mulf %9, %1 : vector<64x128xf32>
    %c0_5 = arith.constant 0 : index
    %11 = memref.load %arg2[%c0_5] : memref<1xf32, #tpu.memory_space<smem>>
    %cst_6 = arith.constant 1.000000e+00 : f32
    %12 = arith.divf %cst_6, %11 : f32
    %13 = vector.broadcast %12 : f32 to vector<64x128xf32>
    %14 = arith.mulf %10, %13 : vector<64x128xf32>
    %cst_7 = arith.constant -4.480000e+02 : f32
    %cst_8 = arith.constant 4.480000e+02 : f32
    %15 = vector.broadcast %cst_7 : f32 to vector<64x128xf32>
    %16 = arith.maximumf %15, %14 : vector<64x128xf32>
    %17 = vector.broadcast %cst_8 : f32 to vector<64x128xf32>
    %18 = arith.minimumf %17, %16 : vector<64x128xf32>
    %19 = arith.truncf %18 : vector<64x128xf32> to vector<64x128xf8E4M3FN>
    %c0_9 = arith.constant 0 : index
    %c0_10 = arith.constant 0 : index
    %20 = vector.load %arg5[%c0_9, %c0_10] : memref<64x128xf8E4M3FN, #tpu.memory_space<vmem>>, vector<64x128xf8E4M3FN>
    tpu.vector_store %arg5[%c0_9, %c0_10], %19 {strides = array<i32>} : memref<64x128xf8E4M3FN, #tpu.memory_space<vmem>>, vector<64x128xf8E4M3FN>,
    return
  }
  func.func @transform_0(%arg0: i32, %arg1: i32, %arg2: memref<1xf32, #tpu.memory_space<smem>>) -> (i32, i32) {
    %c0_i32 = arith.constant 0 : i32
    return %arg0, %arg1 : i32, i32
  }
  func.func @transform_1(%arg0: i32, %arg1: i32, %arg2: memref<1xf32, #tpu.memory_space<smem>>) -> (i32, i32) {
    %c1_i32 = arith.constant 1 : i32
    %0 = arith.addi %arg1, %c1_i32 : i32
    %c0_i32 = arith.constant 0 : i32
    return %arg0, %0 : i32, i32
  }
  func.func @transform_2(%arg0: i32, %arg1: i32, %arg2: memref<1xf32, #tpu.memory_space<smem>>) -> (i32, i32) {
    %c0_i32 = arith.constant 0 : i32
    return %arg0, %arg1 : i32, i32
  }
}

</mosaic_0001>

<llo_original>
// kernel: silu_mul_scaled_fp8_quant.1
$region0: #{silu_mul_scaled_fp8_quant.1}
  #allocation0 [shape = 'u32[]', space=smem, size = 0x4, offset = 0x4, fixed_abs, tag = 'smem constant byte address 0x4 - core index']
  #allocation1 [shape = 'u32[144,128]{1,0:T(1,128)}', space=vmem, size = 0x12000, scoped, tag = 'internal scratch']
  #allocation2 [shape = 's32[1]{0}', space=sflag, size = 0x4, scoped, tag = 'scoped memory for silu_mul_scaled_fp8_quant.1']
  #allocation3 [shape = 'f32[1]{0:T(128)S(6)}', space=smem, size = 0x200, scoped, tag = 'prefetched SMEM operand 0']
  %s0 = inlined_call_operand.<no memory space> [shape: f32[1], index: 0, kind: input, shape index: {}]
  %s1 = inlined_call_operand.hbm [shape: f32[64,256], index: 1, kind: input, shape index: {}, may-alias: {1,2}]
  %s2 = inlined_call_operand.hbm [shape: f32[64,256], index: 2, kind: input, shape index: {}, may-alias: {1,2}]
  %s3 = inlined_call_operand.hbm [shape: f8e4m3fn[64,128], index: 3, kind: output, shape index: {}]
  %s4 = sld [smem:[#allocation0]]
  $region26: #{silu_mul_scaled_fp8_quant.1} parent=0
    _
  %s6 = ssub.s32 1, %s4
  %s7 = scalar_select 0, %s6, %s4
  %8 = sst [smem:[#allocation3]] %s0
  $region1: #{silu_mul_scaled_fp8_quant.1} parent=0
    #allocation4 [shape = 'u8[32768]{0}', space=vmem, size = 0x8000, scoped, tag = 'input window, operand 1, single buffered']
    #allocation5 [shape = 's32[1]{0}', space=sflag, size = 0x4, scoped, tag = 'scoped memory for silu_mul_scaled_fp8_quant.1']
    #allocation6 [shape = 's32[1]{0}', space=sflag, size = 0x4, scoped, tag = 'scoped memory for silu_mul_scaled_fp8_quant.1']
    #allocation7 [shape = 'u8[32768]{0}', space=vmem, size = 0x8000, scoped, tag = 'input window, operand 2, single buffered']
    #allocation8 [shape = 's32[1]{0}', space=sflag, size = 0x4, scoped, tag = 'scoped memory for silu_mul_scaled_fp8_quant.1']
    #allocation9 [shape = 'u8[8192]{0}', space=vmem, size = 0x2000, scoped, tag = 'output window, operand 0, single buffered']
    %9 = vsyncpa [#allocation5], 0
    %10 = vsyncpa [#allocation8], 0
    %11 = vsyncpa [#allocation6], 0
    // Predicated region
    $region2: #{silu_mul_scaled_fp8_quant.1} parent=1 // pred_check
      _
    $region3: #{silu_mul_scaled_fp8_quant.1} parent=1 // pred_check_branch
      %13 = sbr.rel (0) target = $region5
    $region4: #{silu_mul_scaled_fp8_quant.1} parent=1 // pred_region
      %s15 = ssub.s32 1024, 1024
      %16 = vsyncadd [#allocation5], %s15
      %s17 = sshll.u32 [#allocation4], 4
      %s18 = int_to_ptr.vmem [resolvable:$true] %s17
      %23 = dma.hbm_to_vmem [thread:$0]  %s1, 1024, %s18, [#allocation5], 256, 128, 8
    $region5: #{silu_mul_scaled_fp8_quant.1} parent=1 // pred_fallthru
      _
    // Predicated region
    $region6: #{silu_mul_scaled_fp8_quant.1} parent=1 // pred_check
      _
    $region7: #{silu_mul_scaled_fp8_quant.1} parent=1 // pred_check_branch
      %25 = sbr.rel (0) target = $region9
    $region8: #{silu_mul_scaled_fp8_quant.1} parent=1 // pred_region
      %s26 = sadd.s32 0, 1
      %s28 = ssub.s32 1024, 1024
      %29 = vsyncadd [#allocation8], %s28
      %s30 = smul.addr %s26, 128
      %s31 = scalar_lea.hbm %s2, %s30
      %s32 = sshll.u32 [#allocation7], 4
      %s33 = int_to_ptr.vmem [resolvable:$true] %s32
      %38 = dma.hbm_to_vmem [thread:$0]  %s31, 1024, %s33, [#allocation8], 256, 128, 8
    $region9: #{silu_mul_scaled_fp8_quant.1} parent=1 // pred_fallthru
      _
    // Predicated region
    $region10: #{silu_mul_scaled_fp8_quant.1} parent=1 // pred_check
      _
    $region11: #{silu_mul_scaled_fp8_quant.1} parent=1 // pred_check_branch
      %40 = sbr.rel (0) target = $region13
    $region12: #{silu_mul_scaled_fp8_quant.1} parent=1 // pred_region
      %41 = dma.done [#allocation5], 1024
    $region13: #{silu_mul_scaled_fp8_quant.1} parent=1 // pred_fallthru
      _
    // Predicated region
    $region14: #{silu_mul_scaled_fp8_quant.1} parent=1 // pred_check
      _
    $region15: #{silu_mul_scaled_fp8_quant.1} parent=1 // pred_check_branch
      %43 = sbr.rel (0) target = $region17
    $region16: #{silu_mul_scaled_fp8_quant.1} parent=1 // pred_region
      %44 = dma.done [#allocation8], 1024
    $region17: #{silu_mul_scaled_fp8_quant.1} parent=1 // pred_fallthru
      _
    %s45 = sadd.s32 0, 1
    %v46 = vld [vmem:[#allocation4] sm:$0xff]
    %v47 = vld [vmem:[#allocation4 + $0x8] sm:$0xff]
    %v48 = vld [vmem:[#allocation4 + $0x10] sm:$0xff]
    %v49 = vld [vmem:[#allocation4 + $0x18] sm:$0xff]
    %v50 = vld [vmem:[#allocation4 + $0x20] sm:$0xff]
    %v51 = vld [vmem:[#allocation4 + $0x28] sm:$0xff]
    %v52 = vld [vmem:[#allocation4 + $0x30] sm:$0xff]
    %v53 = vld [vmem:[#allocation4 + $0x38] sm:$0xff]
    %v54 = vld [vmem:[#allocation7] sm:$0xff]
    %v55 = vld [vmem:[#allocation7 + $0x8] sm:$0xff]
    %v56 = vld [vmem:[#allocation7 + $0x10] sm:$0xff]
    %v57 = vld [vmem:[#allocation7 + $0x18] sm:$0xff]
    %v58 = vld [vmem:[#allocation7 + $0x20] sm:$0xff]
    %v59 = vld [vmem:[#allocation7 + $0x28] sm:$0xff]
    %v60 = vld [vmem:[#allocation7 + $0x30] sm:$0xff]
    %v61 = vld [vmem:[#allocation7 + $0x38] sm:$0xff]
    %v62 = vmul.f32 %v46, 0.5
    %v63 = vmul.f32 %v47, 0.5
    %v64 = vmul.f32 %v48, 0.5
    %v65 = vmul.f32 %v49, 0.5
    %v66 = vmul.f32 %v50, 0.5
    %v67 = vmul.f32 %v51, 0.5
    %v68 = vmul.f32 %v52, 0.5
    %v69 = vmul.f32 %v53, 0.5
    %v70 = vtanh.pop %v62
    %v71 = vtanh.pop %v63
    %v72 = vtanh.pop %v64
    %v73 = vtanh.pop %v65
    %v74 = vtanh.pop %v66
    %v75 = vtanh.pop %v67
    %v76 = vtanh.pop %v68
    %v77 = vtanh.pop %v69
    %v78 = vadd.f32 %v70, 1.0
    %v79 = vadd.f32 %v71, 1.0
    %v80 = vadd.f32 %v72, 1.0
    %v81 = vadd.f32 %v73, 1.0
    %v82 = vadd.f32 %v74, 1.0
    %v83 = vadd.f32 %v75, 1.0
    %v84 = vadd.f32 %v76, 1.0
    %v85 = vadd.f32 %v77, 1.0
    %v86 = vmul.f32 %v78, 0.5
    %v87 = vmul.f32 %v79, 0.5
    %v88 = vmul.f32 %v80, 0.5
    %v89 = vmul.f32 %v81, 0.5
    %v90 = vmul.f32 %v82, 0.5
    %v91 = vmul.f32 %v83, 0.5
    %v92 = vmul.f32 %v84, 0.5
    %v93 = vmul.f32 %v85, 0.5
    %v94 = vmul.f32 %v46, %v86
    %v95 = vmul.f32 %v47, %v87
    %v96 = vmul.f32 %v48, %v88
    %v97 = vmul.f32 %v49, %v89
    %v98 = vmul.f32 %v50, %v90
    %v99 = vmul.f32 %v51, %v91
    %v100 = vmul.f32 %v52, %v92
    %v101 = vmul.f32 %v53, %v93
    %v102 = vmul.f32 %v94, %v54
    %v103 = vmul.f32 %v95, %v55
    %v104 = vmul.f32 %v96, %v56
    %v105 = vmul.f32 %v97, %v57
    %v106 = vmul.f32 %v98, %v58
    %v107 = vmul.f32 %v99, %v59
    %v108 = vmul.f32 %v100, %v60
    %v109 = vmul.f32 %v101, %v61
    %s110 = sld [smem:[#allocation3]]
    %v111 = vstv %s110
    %v112 = vrcp.pop %v111
    %s113 = vtos %v112
    %v114 = vstv %s113
    %v115 = vmul.f32 %v102, %v114
    %v116 = vmul.f32 %v103, %v114
    %v117 = vmul.f32 %v104, %v114
    %v118 = vmul.f32 %v105, %v114
    %v119 = vmul.f32 %v106, %v114
    %v120 = vmul.f32 %v107, %v114
    %v121 = vmul.f32 %v108, %v114
    %v122 = vmul.f32 %v109, %v114
    %v123 = vmax.f32 %v115, -448.0
    %v124 = vmax.f32 %v116, -448.0
    %v125 = vmax.f32 %v117, -448.0
    %v126 = vmax.f32 %v118, -448.0
    %v127 = vmax.f32 %v119, -448.0
    %v128 = vmax.f32 %v120, -448.0
    %v129 = vmax.f32 %v121, -448.0
    %v130 = vmax.f32 %v122, -448.0
    %v131 = vmin.f32 %v123, 448.0
    %v132 = vmin.f32 %v124, 448.0
    %v133 = vmin.f32 %v125, 448.0
    %v134 = vmin.f32 %v126, 448.0
    %v135 = vmin.f32 %v127, 448.0
    %v136 = vmin.f32 %v128, 448.0
    %v137 = vmin.f32 %v129, 448.0
    %v138 = vmin.f32 %v130, 448.0
    %v139 = vpack.c.f32.eXmY %v131, %v132, 61788
    %v143 = vpack.c.f32.eXmY %v133, %v134, 61788
    %v147 = vpack.c.b8 %v143, %v139
    %v149 = vpack.c.f32.eXmY %v135, %v136, 61788
    %v153 = vpack.c.f32.eXmY %v137, %v138, 61788
    %v157 = vpack.c.b8 %v153, %v149
    %159 = vst [vmem:[#allocation9] sm:$0xff] %v147
    %160 = vst [vmem:[#allocation9 + $0x8] sm:$0xff] %v157
    // Predicated region
    $region18: #{silu_mul_scaled_fp8_quant.1} parent=1 // pred_check
      _
    $region19: #{silu_mul_scaled_fp8_quant.1} parent=1 // pred_check_branch
      %162 = sbr.rel (0) target = $region21
    $region20: #{silu_mul_scaled_fp8_quant.1} parent=1 // pred_region
      %s164 = ssub.s32 256, 256
      %165 = vsyncadd [#allocation6], %s164
      %s166 = sshll.u32 [#allocation9], 4
      %s167 = int_to_ptr.vmem [resolvable:$true] %s166
      %172 = dma.vmem_to_hbm [thread:$0]  %s167, 256, %s3, [#allocation6], 128, 128, 8
    $region21: #{silu_mul_scaled_fp8_quant.1} parent=1 // pred_fallthru
      _
    // Predicated region
    $region22: #{silu_mul_scaled_fp8_quant.1} parent=1 // pred_check
      _
    $region23: #{silu_mul_scaled_fp8_quant.1} parent=1 // pred_check_branch
      %174 = sbr.rel (0) target = $region25
    $region24: #{silu_mul_scaled_fp8_quant.1} parent=1 // pred_region
      %175 = dma.done [#allocation6], 256
    $region25: #{silu_mul_scaled_fp8_quant.1} parent=1 // pred_fallthru
      _
    %176 = vsyncpa [#allocation5], 1
    %177 = vsyncpa [#allocation8], 1
    %178 = vsyncpa [#allocation6], 1

</llo_original>
